<compile_context>
chip_gen: v7x
topology: tpu7x:2x2x1
jax: 0.10.0
libtpu: 0.0.40
codegen_flags: <defaults>
</compile_context>

<pallas_src>
from functools import partial

import jax
import jax.numpy as jnp
from jax.experimental import pallas as pl
from jax.experimental.pallas import tpu as pltpu


def _concat_pool_kernel(x_ref, o_ref, mx_ref, sm_ref, *, S, TS, mask_last):
    # x_ref : (TR, TS)      input chunk (VMEM)
    # o_ref : (TR, 2)       per-row [max, mean]; resident across the spatial-chunk axis
    # mx_ref: (TR, 1) f32   running max (VMEM scratch)
    # sm_ref: (TR, 1) f32   running sum (VMEM scratch)
    s = pl.program_id(1)
    n_s = pl.num_programs(1)

    @pl.when(s == 0)
    def _init():
        mx_ref[...] = jnp.full_like(mx_ref, -jnp.inf)
        sm_ref[...] = jnp.zeros_like(sm_ref)

    # Reduce in f32 (exact for max, accurate for the sum; safe on all generations).
    x = x_ref[...].astype(jnp.float32)

    def _accumulate(xv):
        mx_ref[...] = jnp.maximum(mx_ref[...], jnp.max(xv, axis=-1, keepdims=True))
        sm_ref[...] = sm_ref[...] + jnp.sum(xv, axis=-1, keepdims=True)

    if mask_last:
        # Mask work only on the ragged final chunk; steady-state chunks stay mask-free.
        @pl.when(s < n_s - 1)
        def _steady():
            _accumulate(x)

        @pl.when(s == n_s - 1)
        def _ragged():
            col = jax.lax.broadcasted_iota(jnp.int32, x.shape, 1)
            valid = (s * TS + col) < S
            mx_ref[...] = jnp.maximum(
                mx_ref[...],
                jnp.max(jnp.where(valid, x, -jnp.inf), axis=-1, keepdims=True))
            sm_ref[...] = sm_ref[...] + jnp.sum(
                jnp.where(valid, x, 0.0), axis=-1, keepdims=True)
    else:
        _accumulate(x)

    @pl.when(s == n_s - 1)
    def _finalize():
        o_ref[:, 0:1] = mx_ref[...].astype(o_ref.dtype)
        o_ref[:, 1:2] = (sm_ref[...] * (1.0 / S)).astype(o_ref.dtype)


def _round_up(v, m):
    return ((v + m - 1) // m) * m


def _choose_tiles(R, S, itemsize, budget):
    """Pick (TR, TS): row tile and spatial-chunk size under a per-block VMEM budget."""
    LANE, SUB = 128, 8
    TS_FLOOR = 2048  # >= 8 KiB (f32) contiguous segment per DMA row

    # Row-tile cap: full R if tiny; otherwise a multiple of 8 that leaves >=2 blocks on
    # the (parallel) row axis so both v7x TensorCores get work.
    if R <= SUB:
        tr_cap = R
    else:
        tr_cap = _round_up(pl.cdiv(R, 2), SUB)

    # Whole spatial extent per step if it fits the budget.
    if tr_cap * S * itemsize <= budget:
        return tr_cap, S

    # Shrink the row tile (multiple of 8) while keeping the full spatial extent.
    tr_full = (budget // (S * itemsize)) // SUB * SUB
    if tr_full >= SUB:
        return min(tr_cap, tr_full), S

    # Chunk the spatial axis; keep chunks >= TS_FLOOR (shrink rows, not the segment size).
    tr = min(tr_cap, SUB)
    ts = (budget // (tr * itemsize)) // LANE * LANE
    ts = max(TS_FLOOR, ts)
    ts = min(ts, S)
    return tr, ts


def adaptive_concat_pool3d(x, *, tile_budget_bytes=8 << 20):
    """x: (N, C, D, H, W) -> (N, 2*C, 1, 1, 1), concat([max_pool, avg_pool], channel)."""
    N, C, D, H, W = x.shape
    S = D * H * W
    R = N * C
    x_flat = x.reshape(R, S)
    itemsize = jnp.dtype(x.dtype).itemsize

    TR, TS = _choose_tiles(R, S, itemsize, tile_budget_bytes)
    grid = (pl.cdiv(R, TR), pl.cdiv(S, TS))
    mask_last = (S % TS) != 0

    out2 = pl.pallas_call(
        partial(_concat_pool_kernel, S=S, TS=TS, mask_last=mask_last),
        out_shape=jax.ShapeDtypeStruct((R, 2), x.dtype),
        grid_spec=pltpu.PrefetchScalarGridSpec(
            num_scalar_prefetch=0,
            grid=grid,
            in_specs=[pl.BlockSpec((TR, TS), lambda r, s: (r, s))],
            out_specs=pl.BlockSpec((TR, 2), lambda r, s: (r, 0)),
            scratch_shapes=[
                pltpu.VMEM((TR, 1), jnp.float32),   # running max
                pltpu.VMEM((TR, 1), jnp.float32),   # running sum
            ],
        ),
        compiler_params=pltpu.CompilerParams(
            dimension_semantics=("parallel", "arbitrary"),
            vmem_limit_bytes=48 << 20,
        ),
    )(x_flat)

    # (R, 2) -> (N, C, 2) -> (N, 2, C) -> (N, 2C, 1, 1, 1); max channels first, then avg.
    return out2.reshape(N, C, 2).transpose(0, 2, 1).reshape(N, 2 * C, 1, 1, 1)


def _reference(x):
    mx = jnp.max(x, axis=(2, 3, 4), keepdims=True)
    av = jnp.mean(x, axis=(2, 3, 4), keepdims=True)
    return jnp.concatenate([mx, av], axis=1)


if __name__ == "__main__":
    key = jax.random.PRNGKey(0)
    k1, k2, k3 = jax.random.split(key, 3)

    # Test 1: (N, C, D, H, W) = (2, 4, 4, 8, 8) -> R = 8, S = 256, single-tile path.
    x1 = jax.random.normal(k1, (2, 4, 4, 8, 8), dtype=jnp.float32)
    out1 = jax.block_until_ready(adaptive_concat_pool3d(x1))
    ref1 = _reference(x1)
    assert out1.shape == (2, 8, 1, 1, 1), out1.shape
    assert jnp.allclose(out1, ref1, atol=1e-5, rtol=1e-5), "mismatch (single tile)"

    # Test 2: force the spatial-chunked + masked-last-chunk path with a tiny budget.
    # (2, 3, 3, 28, 28) -> R = 6, S = 2352; TS = 2048 -> 2 chunks, ragged last chunk.
    x2 = jax.random.normal(k2, (2, 3, 3, 28, 28), dtype=jnp.float32)
    out2 = jax.block_until_ready(adaptive_concat_pool3d(x2, tile_budget_bytes=4096))
    ref2 = _reference(x2)
    assert out2.shape == (2, 6, 1, 1, 1), out2.shape
    assert jnp.allclose(out2, ref2, atol=1e-5, rtol=1e-5), "mismatch (chunked/masked)"

    # Test 3: ragged row tiles + >=2 parallel row blocks.
    # (3, 4, 2, 5, 7) -> R = 12, S = 70; TR = 8 -> row grid of 2 with a ragged edge block.
    x3 = jax.random.normal(k3, (3, 4, 2, 5, 7), dtype=jnp.float32)
    out3 = jax.block_until_ready(adaptive_concat_pool3d(x3))
    ref3 = _reference(x3)
    assert out3.shape == (3, 8, 1, 1, 1), out3.shape
    assert jnp.allclose(out3, ref3, atol=1e-5, rtol=1e-5), "mismatch (ragged rows)"

    print("KERNEL_OK")
</pallas_src>

<mosaic_0001>
module attributes {stable_mosaic.version = 11 : i64} {
  func.func @_concat_pool_kernel(%arg0: i32, %arg1: i32, %arg2: memref<8x256xf32, #tpu.memory_space<vmem>>, %arg3: memref<8x2xf32, #tpu.memory_space<vmem>>, %arg4: memref<8x1xf32, #tpu.memory_space<vmem>>, %arg5: memref<8x1xf32, #tpu.memory_space<vmem>>) attributes {dimension_semantics = [#tpu.dimension_semantics<parallel>, #tpu.dimension_semantics<arbitrary>], iteration_bounds = array<i64: 1, 1>, scalar_prefetch = 0 : i64, scratch_operands = 2 : i64, tpu.core_type = #tpu.core_type<tc>, window_params = [{transform_indices = @transform_0, window_bounds = array<i64: 8, 256>}, {transform_indices = @transform_1, window_bounds = array<i64: 8, 2>}]} {
    %c0_i32 = arith.constant 0 : i32
    %0 = arith.cmpi eq, %arg1, %c0_i32 : i32
    %1 = arith.extui %0 : i1 to i32
    %c0_i32_0 = arith.constant 0 : i32
    %2 = arith.cmpi ne, %1, %c0_i32_0 : i32
    scf.if %2 {
      %cst_13 = arith.constant 0xFF800000 : f32
      %17 = vector.broadcast %cst_13 : f32 to vector<8x1xf32>
      %c0_14 = arith.constant 0 : index
      %c0_15 = arith.constant 0 : index
      %18 = vector.load %arg4[%c0_14, %c0_15] : memref<8x1xf32, #tpu.memory_space<vmem>>, vector<8x1xf32>
      tpu.vector_store %arg4[%c0_14, %c0_15], %17 {strides = array<i32>} : memref<8x1xf32, #tpu.memory_space<vmem>>, vector<8x1xf32>,
      %cst_16 = arith.constant 0.000000e+00 : f32
      %19 = vector.broadcast %cst_16 : f32 to vector<8x1xf32>
      %c0_17 = arith.constant 0 : index
      %c0_18 = arith.constant 0 : index
      %20 = vector.load %arg5[%c0_17, %c0_18] : memref<8x1xf32, #tpu.memory_space<vmem>>, vector<8x1xf32>
      tpu.vector_store %arg5[%c0_17, %c0_18], %19 {strides = array<i32>} : memref<8x1xf32, #tpu.memory_space<vmem>>, vector<8x1xf32>,
    } else {
    }
    %c0 = arith.constant 0 : index
    %c0_1 = arith.constant 0 : index
    %3 = vector.load %arg2[%c0, %c0_1] : memref<8x256xf32, #tpu.memory_space<vmem>>, vector<8x256xf32>
    %c0_2 = arith.constant 0 : index
    %c0_3 = arith.constant 0 : index
    %4 = vector.load %arg4[%c0_2, %c0_3] : memref<8x1xf32, #tpu.memory_space<vmem>>, vector<8x1xf32>
    %cst = arith.constant dense<0xFF800000> : vector<8xf32>
    %5 = vector.multi_reduction <maximumf>, %3, %cst [1] : vector<8x256xf32> to vector<8xf32>
    %6 = vector.shape_cast %5 : vector<8xf32> to vector<8x1xf32>
    %7 = arith.maximumf %4, %6 : vector<8x1xf32>
    %c0_4 = arith.constant 0 : index
    %c0_5 = arith.constant 0 : index
    %8 = vector.load %arg4[%c0_4, %c0_5] : memref<8x1xf32, #tpu.memory_space<vmem>>, vector<8x1xf32>
    tpu.vector_store %arg4[%c0_4, %c0_5], %7 {strides = array<i32>} : memref<8x1xf32, #tpu.memory_space<vmem>>, vector<8x1xf32>,
    %c0_6 = arith.constant 0 : index
    %c0_7 = arith.constant 0 : index
    %9 = vector.load %arg5[%c0_6, %c0_7] : memref<8x1xf32, #tpu.memory_space<vmem>>, vector<8x1xf32>
    %cst_8 = arith.constant dense<0.000000e+00> : vector<8xf32>
    %10 = vector.multi_reduction <add>, %3, %cst_8 [1] : vector<8x256xf32> to vector<8xf32>
    %11 = vector.shape_cast %10 : vector<8xf32> to vector<8x1xf32>
    %12 = arith.addf %9, %11 : vector<8x1xf32>
    %c0_9 = arith.constant 0 : index
    %c0_10 = arith.constant 0 : index
    %13 = vector.load %arg5[%c0_9, %c0_10] : memref<8x1xf32, #tpu.memory_space<vmem>>, vector<8x1xf32>
    tpu.vector_store %arg5[%c0_9, %c0_10], %12 {strides = array<i32>} : memref<8x1xf32, #tpu.memory_space<vmem>>, vector<8x1xf32>,
    %c0_i32_11 = arith.constant 0 : i32
    %14 = arith.cmpi eq, %arg1, %c0_i32_11 : i32
    %15 = arith.extui %14 : i1 to i32
    %c0_i32_12 = arith.constant 0 : i32
    %16 = arith.cmpi ne, %15, %c0_i32_12 : i32
    scf.if %16 {
      %c0_13 = arith.constant 0 : index
      %c0_14 = arith.constant 0 : index
      %17 = vector.load %arg4[%c0_13, %c0_14] : memref<8x1xf32, #tpu.memory_space<vmem>>, vector<8x1xf32>
      %c0_15 = arith.constant 0 : index
      %c0_16 = arith.constant 0 : index
      %18 = vector.load %arg3[%c0_15, %c0_16] : memref<8x2xf32, #tpu.memory_space<vmem>>, vector<8x1xf32>
      tpu.vector_store %arg3[%c0_15, %c0_16], %17 {strides = array<i32>} : memref<8x2xf32, #tpu.memory_space<vmem>>, vector<8x1xf32>,
      %c0_17 = arith.constant 0 : index
      %c0_18 = arith.constant 0 : index
      %19 = vector.load %arg5[%c0_17, %c0_18] : memref<8x1xf32, #tpu.memory_space<vmem>>, vector<8x1xf32>
      %cst_19 = arith.constant 3.906250e-03 : f32
      %20 = vector.broadcast %cst_19 : f32 to vector<8x1xf32>
      %21 = arith.mulf %19, %20 : vector<8x1xf32>
      %c0_20 = arith.constant 0 : index
      %c1 = arith.constant 1 : index
      %22 = vector.load %arg3[%c0_20, %c1] : memref<8x2xf32, #tpu.memory_space<vmem>>, vector<8x1xf32>
      tpu.vector_store %arg3[%c0_20, %c1], %21 {strides = array<i32>} : memref<8x2xf32, #tpu.memory_space<vmem>>, vector<8x1xf32>,
    } else {
    }
    return
  }
  func.func @transform_0(%arg0: i32, %arg1: i32) -> (i32, i32) {
    %c0_i32 = arith.constant 0 : i32
    return %arg0, %arg1 : i32, i32
  }
  func.func @transform_1(%arg0: i32, %arg1: i32) -> (i32, i32) {
    %c0_i32 = arith.constant 0 : i32
    %c0_i32_0 = arith.constant 0 : i32
    return %arg0, %c0_i32 : i32, i32
  }
}

</mosaic_0001>

<llo_original>
// kernel: tpu_custom_call.1
$region0: #{tpu_custom_call.1}
  #allocation0 [shape = 'u32[]', space=smem, size = 0x4, offset = 0x4, fixed_abs, tag = 'smem constant byte address 0x4 - core index']
  #allocation1 [shape = 'u32[144,128]{1,0:T(1,128)}', space=vmem, size = 0x12000, scoped, tag = 'internal scratch']
  #allocation2 [shape = 'f32[8,1]{1,0:T(8,128)}', space=vmem, size = 0x1000, scoped, tag = 'scratch operand']
  #allocation3 [shape = 'f32[8,1]{1,0:T(8,128)}', space=vmem, size = 0x1000, scoped, tag = 'scratch operand']
  %s0 = inlined_call_operand.hbm [shape: f32[8,256], index: 0, kind: input, shape index: {}]
  %s1 = inlined_call_operand.vmem [shape: f32[8,2], index: 1, kind: output, shape index: {}]
  %s2 = sld [smem:[#allocation0]]
  $region26: #{tpu_custom_call.1} parent=0
    _
  %s4 = ssub.s32 1, %s2
  %s5 = scalar_select 0, %s4, %s2
  $region1: #{tpu_custom_call.1} parent=0
    #allocation4 [shape = 'u8[8192]{0}', space=vmem, size = 0x2000, scoped, tag = 'input window, operand 0, single buffered']
    #allocation5 [shape = 's32[1]{0}', space=sflag, size = 0x4, scoped, tag = 'scoped memory for tpu_custom_call.1']
    %6 = vsyncpa [#allocation5], 0
    // Predicated region
    $region2: #{tpu_custom_call.1} parent=1 // pred_check
      _
    $region3: #{tpu_custom_call.1} parent=1 // pred_check_branch
      %8 = sbr.rel (0) target = $region5
    $region4: #{tpu_custom_call.1} parent=1 // pred_region
      %s10 = ssub.s32 256, 256
      %11 = vsyncadd [#allocation5], %s10
      %s13 = sshll.u32 [#allocation4], 4
      %s14 = int_to_ptr.vmem [resolvable:$true] %s13
      %16 = dma.hbm_to_vmem [thread:$0]  %s0, 256, %s14, [#allocation5]
    $region5: #{tpu_custom_call.1} parent=1 // pred_fallthru
      _
    // Predicated region
    $region6: #{tpu_custom_call.1} parent=1 // pred_check
      _
    $region7: #{tpu_custom_call.1} parent=1 // pred_check_branch
      %18 = sbr.rel (0) target = $region9
    $region8: #{tpu_custom_call.1} parent=1 // pred_region
      %19 = dma.done [#allocation5], 256
    $region9: #{tpu_custom_call.1} parent=1 // pred_fallthru
      _
    %p20 = scmp.eq.s32.totalorder 0, 0
    // Predicated region
    $region10: #{tpu_custom_call.1} parent=1 // pred_check
      %p21 = pneg %p20
    $region11: #{tpu_custom_call.1} parent=1 // pred_check_branch
      %23 = sbr.rel (%p21) target = $region13
    $region12: #{tpu_custom_call.1} parent=1 // pred_region
      %vm24 = vcmask 7168
      %25 = vst.msk [vmem:[#allocation2] sm:$0xff] %vm24, -inf
      %26 = vst.msk [vmem:[#allocation3] sm:$0xff] %vm24, 0.0
    $region13: #{tpu_custom_call.1} parent=1 // pred_fallthru
      _
    %v27 = vld [vmem:[#allocation4] sm:$0xff]
    %v28 = vld [vmem:[#allocation4 + $0x8] sm:$0xff]
    %v29 = vld [vmem:[#allocation2] sm:$0xff]
    %v30 = vmax.f32 %v27, %v28
    %31 = vmax.xlane.f32.xlu0 %v30
    %v32 = vpop.xlane.xlu0 %31
    %v33 = vmax.f32 %v29, %v32
    %vm34 = vcmask 7168
    %35 = vst.msk [vmem:[#allocation2] sm:$0xff] %vm34, %v33
    %v36 = vld [vmem:[#allocation3] sm:$0xff]
    %v37 = vadd.f32 %v27, %v28
    %38 = vadd.xlane.f32.xlu0 %v37
    %v39 = vpop.xlane.xlu0 %38
    %v40 = vadd.f32 %v36, %v39
    %41 = vst.msk [vmem:[#allocation3] sm:$0xff] %vm34, %v40
    // Predicated region
    $region14: #{tpu_custom_call.1} parent=1 // pred_check
      %p42 = pneg %p20
    $region15: #{tpu_custom_call.1} parent=1 // pred_check_branch
      %44 = sbr.rel (%p42) target = $region17
    $region16: #{tpu_custom_call.1} parent=1 // pred_region
      %v45 = vld [vmem:[#allocation2] sm:$0xff]
      %46 = vst.msk [vmem:[%s1] sm:$0xff] %vm34, %v45
      %v47 = vld [vmem:[#allocation3] sm:$0xff]
      %v48 = vmul.f32 %v47, 0.00390625
      %50 = vrot.lane.b32.xlu0 %v48, 1
      %v51 = vpop.permute.xlu0 %50
      %vm53 = vcmask 15368
      %54 = vst.msk [vmem:[%s1] sm:$0xff] %vm53, %v51
    $region17: #{tpu_custom_call.1} parent=1 // pred_fallthru
      _
    // Predicated region
    $region18: #{tpu_custom_call.1} parent=1 // pred_check
      _
    $region19: #{tpu_custom_call.1} parent=1 // pred_check_branch
      %56 = sbr.rel (0) target = $region21
    $region20: #{tpu_custom_call.1} parent=1 // pred_region
      _
    $region21: #{tpu_custom_call.1} parent=1 // pred_fallthru
      _
    // Predicated region
    $region22: #{tpu_custom_call.1} parent=1 // pred_check
      _
    $region23: #{tpu_custom_call.1} parent=1 // pred_check_branch
      %58 = sbr.rel (0) target = $region25
    $region24: #{tpu_custom_call.1} parent=1 // pred_region
      _
    $region25: #{tpu_custom_call.1} parent=1 // pred_fallthru
      _
    %59 = vsyncpa [#allocation5], 1

</llo_original>
